<compile_context>
chip_gen: v6e
topology: v6e:2x2x1
jax: 0.10.0
libtpu: 0.0.40
codegen_flags: <defaults>
</compile_context>

<pallas_src>
import functools

import jax
import jax.numpy as jnp
from jax import lax
from jax.experimental import pallas as pl
from jax.experimental.pallas import tpu as pltpu


def _cpl_kernel(z_ref, col_lab_ref, row_lab_ref, *rest,
                inv_temperature, tile_b, batch_size, num_proto):
    """One batch tile: similarities vs all batch rows (+ prototypes), masked
    log-softmax-style per-instance loss."""
    if num_proto > 0:
        proto_ref, out_ref = rest
    else:
        (out_ref,) = rest

    # LHS tile: slice TILE_B rows out of the resident z block.
    if tile_b == batch_size:
        zt = z_ref[...]                                       # (TILE_B, D)
    else:
        start = pl.multiple_of(pl.program_id(0) * tile_b, tile_b)
        zt = z_ref[pl.ds(start, tile_b), :]                   # (TILE_B, D)

    # Fold 1/temperature into the small (TILE_B, D) tile, not the (TILE_B, N) logits.
    zt = zt * jnp.asarray(inv_temperature, dtype=zt.dtype)

    # Contract dim 1 of both operands: feeds the MXU directly from the (rows, D)
    # layout without an explicit transpose of the RHS.
    dn = (((1,), (1,)), ((), ()))
    logits_z = lax.dot_general(zt, z_ref[...], dn,
                               preferred_element_type=jnp.float32)   # (TILE_B, B)

    if num_proto > 0:
        logits_p = lax.dot_general(zt, proto_ref[...], dn,
                                   preferred_element_type=jnp.float32)  # (TILE_B, P)
        row_max = jnp.maximum(jnp.max(logits_z, axis=1, keepdims=True),
                              jnp.max(logits_p, axis=1, keepdims=True))
    else:
        row_max = jnp.max(logits_z, axis=1, keepdims=True)

    sz = logits_z - row_max                                   # (TILE_B, B)

    # Same-class mask over batch columns only (the PyTorch mask is zero for
    # prototype columns, so prototypes always land in the denominator).
    same = row_lab_ref[...] == col_lab_ref[...]               # (TILE_B, B) bool

    sum_same = jnp.sum(jnp.where(same, 1.0, 0.0), axis=1, keepdims=True)
    numer = jnp.sum(jnp.where(same, sz, 0.0), axis=1, keepdims=True)
    denom = jnp.sum(jnp.where(same, 0.0, jnp.exp(sz)), axis=1, keepdims=True)
    if num_proto > 0:
        denom = denom + jnp.sum(jnp.exp(logits_p - row_max), axis=1, keepdims=True)

    # loss_i = -(1/|same_i|) * sum_same(sz) - log(sum_diff(exp(sz)))
    out_ref[...] = -numer / sum_same - jnp.log(denom)         # (TILE_B, 1)


def _pick_tile_b(batch_size):
    # Largest sublane-aligned tile that still yields >= 2 grid steps
    # (pipelining / megacore); otherwise process the whole batch in one tile.
    for t in (256, 128, 64, 32, 16, 8):
        if batch_size % t == 0 and batch_size // t >= 2:
            return t
    return batch_size


def contrastive_prototypical_loss(z_feature, label, previous_prototype=None,
                                  temperature=3.0, reduction="mean"):
    assert z_feature.ndim > 1, "z_feature must have number of dimension > 1."
    if z_feature.ndim > 2:
        z_feature = z_feature.reshape(z_feature.shape[0], -1)
    B, D = z_feature.shape
    assert B == label.shape[0], "z_feature.shape[0] != label.shape[0]"

    if previous_prototype is not None:
        if previous_prototype.ndim > 2:
            previous_prototype = previous_prototype.reshape(
                previous_prototype.shape[0], -1)
        assert previous_prototype.shape[1] == D
        P = previous_prototype.shape[0]
    else:
        P = 0
    N = B + P

    labels_i32 = label.astype(jnp.int32)
    row_labels = labels_i32.reshape(B, 1)      # (B, 1)  tiled over the grid
    col_labels = labels_i32.reshape(1, B)      # (1, B)  lane-dense, resident

    tile_b = _pick_tile_b(B)
    grid = (B // tile_b,)

    kernel = functools.partial(
        _cpl_kernel,
        inv_temperature=1.0 / float(temperature),
        tile_b=tile_b, batch_size=B, num_proto=P)

    in_specs = [
        pl.BlockSpec((B, D), lambda i: (0, 0)),        # z: resident (DMA'd once)
        pl.BlockSpec((1, B), lambda i: (0, 0)),        # column labels: resident
        pl.BlockSpec((tile_b, 1), lambda i: (i, 0)),   # row labels: per tile
    ]
    args = [z_feature, col_labels, row_labels]
    if P > 0:
        in_specs.append(pl.BlockSpec((P, D), lambda i: (0, 0)))  # prototypes: resident
        args.append(previous_prototype)

    itemsize = jnp.dtype(z_feature.dtype).itemsize
    cost = pl.CostEstimate(
        flops=2 * B * N * D,
        transcendentals=B * N,
        bytes_accessed=(B + P) * D * itemsize + 3 * B * 4)

    # Rough VMEM need: resident z/prototypes (double-buffered) + per-tile temps.
    # Capped at 64 MiB so the request stays legal on v7x.
    vmem_need = 2 * (B + P) * D * itemsize + 8 * tile_b * max(N, 128) * 4
    vmem_limit = int(min(max(vmem_need, 32 * 1024 * 1024), 64 * 1024 * 1024))

    # TODO(synk): for mean/sum, accumulate the scalar in-kernel (and emit a
    # lane-dense output for 'none') instead of the (B, 1) per-instance column;
    # for very large prototype sets on v7x, tile N with an online max/sum.
    per_instance = pl.pallas_call(
        kernel,
        grid=grid,
        in_specs=in_specs,
        out_specs=pl.BlockSpec((tile_b, 1), lambda i: (i, 0)),
        out_shape=jax.ShapeDtypeStruct((B, 1), jnp.float32),
        compiler_params=pltpu.CompilerParams(
            dimension_semantics=("parallel",),
            vmem_limit_bytes=vmem_limit),
        cost_estimate=cost,
    )(*args)

    if reduction == "mean":
        return jnp.mean(per_instance)
    elif reduction == "sum":
        return jnp.sum(per_instance)
    elif reduction == "none":
        return per_instance[:, 0]
    raise ValueError(reduction)


def _reference(z, label, proto, temperature=3.0):
    """Pure-JAX reference. Mathematically identical to the PyTorch forward:
    the PyTorch `sum(exp(logits*diff)) - sum(mask_same)` equals
    `sum_over_diff(exp(logits))` exactly in real arithmetic; this form is the
    numerically stable one."""
    B, _ = z.shape
    concat = z if proto is None else jnp.concatenate([z, proto], axis=0)
    N = concat.shape[0]
    logits = (z @ concat.T) / temperature
    labels = label.reshape(-1, 1)
    same = jnp.zeros((B, N), bool).at[:, :B].set(labels == labels.T)
    logits = logits - jnp.max(logits, axis=1, keepdims=True)
    sum_same = jnp.sum(jnp.where(same, 1.0, 0.0), axis=1, keepdims=True)
    numer = jnp.sum(jnp.where(same, logits, 0.0), axis=1, keepdims=True)
    denom = jnp.sum(jnp.where(same, 0.0, jnp.exp(logits)), axis=1, keepdims=True)
    loss = -numer / sum_same - jnp.log(denom)
    return jnp.mean(loss)


if __name__ == "__main__":
    key = jax.random.PRNGKey(0)
    k1, k2, k3 = jax.random.split(key, 3)

    B, D, P, num_classes = 8, 32, 8, 4
    z = jax.random.normal(k1, (B, D), dtype=jnp.float32)
    label = jax.random.randint(k2, (B,), 0, num_classes, dtype=jnp.int32)
    prototypes = jax.random.normal(k3, (P, D), dtype=jnp.float32)

    # with prototypes
    out = jax.block_until_ready(
        contrastive_prototypical_loss(z, label, prototypes, temperature=3.0))
    ref = _reference(z, label, prototypes, temperature=3.0)
    assert jnp.allclose(out, ref, rtol=1e-4, atol=1e-4), (out, ref)

    # previous_prototype=None path
    out2 = jax.block_until_ready(
        contrastive_prototypical_loss(z, label, None, temperature=3.0))
    ref2 = _reference(z, label, None, temperature=3.0)
    assert jnp.allclose(out2, ref2, rtol=1e-4, atol=1e-4), (out2, ref2)

    # exercise the tiled (grid > 1) path
    B2 = 32
    kk1, kk2 = jax.random.split(k1)
    z2 = jax.random.normal(kk1, (B2, D), dtype=jnp.float32)
    label2 = jax.random.randint(kk2, (B2,), 0, num_classes, dtype=jnp.int32)
    out3 = jax.block_until_ready(
        contrastive_prototypical_loss(z2, label2, prototypes, temperature=3.0))
    ref3 = _reference(z2, label2, prototypes, temperature=3.0)
    assert jnp.allclose(out3, ref3, rtol=1e-4, atol=1e-4), (out3, ref3)

    print("KERNEL_OK")
</pallas_src>

<mosaic_0001>
module attributes {stable_mosaic.version = 11 : i64} {
  func.func @_cpl_kernel(%arg0: i32, %arg1: memref<8x32xf32, #tpu.memory_space<vmem>>, %arg2: memref<1x8xi32, #tpu.memory_space<vmem>>, %arg3: memref<8x1xi32, #tpu.memory_space<vmem>>, %arg4: memref<8x32xf32, #tpu.memory_space<vmem>>, %arg5: memref<8x1xf32, #tpu.memory_space<vmem>>) attributes {dimension_semantics = [#tpu.dimension_semantics<parallel>], iteration_bounds = array<i64: 1>, scalar_prefetch = 0 : i64, scratch_operands = 0 : i64, tpu.core_type = #tpu.core_type<tc>, window_params = [{pipeline_mode = #tpu.pipeline_mode<synchronous>, transform_indices = @transform_0, window_bounds = array<i64: 8, 32>}, {pipeline_mode = #tpu.pipeline_mode<synchronous>, transform_indices = @transform_1, window_bounds = array<i64: 1, 8>}, {transform_indices = @transform_2, window_bounds = array<i64: 8, 1>}, {pipeline_mode = #tpu.pipeline_mode<synchronous>, transform_indices = @transform_3, window_bounds = array<i64: 8, 32>}, {transform_indices = @transform_4, window_bounds = array<i64: 8, 1>}]} {
    %c0 = arith.constant 0 : index
    %c0_0 = arith.constant 0 : index
    %0 = vector.load %arg1[%c0, %c0_0] : memref<8x32xf32, #tpu.memory_space<vmem>>, vector<8x32xf32>
    %cst = arith.constant 0.333333343 : f32
    %1 = vector.broadcast %cst : f32 to vector<8x32xf32>
    %2 = arith.mulf %0, %1 : vector<8x32xf32>
    %c0_1 = arith.constant 0 : index
    %c0_2 = arith.constant 0 : index
    %3 = vector.load %arg1[%c0_1, %c0_2] : memref<8x32xf32, #tpu.memory_space<vmem>>, vector<8x32xf32>
    %cst_3 = arith.constant dense<0.000000e+00> : vector<8x8xf32>
    %4 = tpu.matmul %2, %3, %cst_3 {dimension_numbers = #tpu.dot_dimension_numbers<[1], [1], [0], [0], [0, 0, 1, 0], [], []>} : vector<8x32xf32>, vector<8x32xf32>, vector<8x8xf32> -> vector<8x8xf32>
    %c0_4 = arith.constant 0 : index
    %c0_5 = arith.constant 0 : index
    %5 = vector.load %arg4[%c0_4, %c0_5] : memref<8x32xf32, #tpu.memory_space<vmem>>, vector<8x32xf32>
    %cst_6 = arith.constant dense<0.000000e+00> : vector<8x8xf32>
    %6 = tpu.matmul %2, %5, %cst_6 {dimension_numbers = #tpu.dot_dimension_numbers<[1], [1], [0], [0], [0, 0, 1, 0], [], []>} : vector<8x32xf32>, vector<8x32xf32>, vector<8x8xf32> -> vector<8x8xf32>
    %cst_7 = arith.constant dense<0xFF800000> : vector<8xf32>
    %7 = vector.multi_reduction <maximumf>, %4, %cst_7 [1] : vector<8x8xf32> to vector<8xf32>
    %8 = vector.shape_cast %7 : vector<8xf32> to vector<8x1xf32>
    %cst_8 = arith.constant dense<0xFF800000> : vector<8xf32>
    %9 = vector.multi_reduction <maximumf>, %6, %cst_8 [1] : vector<8x8xf32> to vector<8xf32>
    %10 = vector.shape_cast %9 : vector<8xf32> to vector<8x1xf32>
    %11 = arith.maximumf %8, %10 : vector<8x1xf32>
    %12 = vector.broadcast %11 : vector<8x1xf32> to vector<8x8xf32>
    %13 = arith.subf %4, %12 : vector<8x8xf32>
    %c0_9 = arith.constant 0 : index
    %c0_10 = arith.constant 0 : index
    %14 = vector.load %arg3[%c0_9, %c0_10] : memref<8x1xi32, #tpu.memory_space<vmem>>, vector<8x1xi32>
    %c0_11 = arith.constant 0 : index
    %c0_12 = arith.constant 0 : index
    %15 = vector.load %arg2[%c0_11, %c0_12] : memref<1x8xi32, #tpu.memory_space<vmem>>, vector<1x8xi32>
    %16 = vector.broadcast %14 : vector<8x1xi32> to vector<8x8xi32>
    %17 = vector.broadcast %15 : vector<1x8xi32> to vector<8x8xi32>
    %18 = arith.cmpi eq, %16, %17 : vector<8x8xi32>
    %cst_13 = arith.constant 1.000000e+00 : f32
    %cst_14 = arith.constant 0.000000e+00 : f32
    %19 = vector.broadcast %cst_13 : f32 to vector<8x8xf32>
    %20 = vector.broadcast %cst_14 : f32 to vector<8x8xf32>
    %21 = arith.select %18, %19, %20 : vector<8x8xi1>, vector<8x8xf32>
    %cst_15 = arith.constant dense<0.000000e+00> : vector<8xf32>
    %22 = vector.multi_reduction <add>, %21, %cst_15 [1] : vector<8x8xf32> to vector<8xf32>
    %23 = vector.shape_cast %22 : vector<8xf32> to vector<8x1xf32>
    %cst_16 = arith.constant 0.000000e+00 : f32
    %24 = vector.broadcast %cst_16 : f32 to vector<8x8xf32>
    %25 = arith.select %18, %13, %24 : vector<8x8xi1>, vector<8x8xf32>
    %cst_17 = arith.constant dense<0.000000e+00> : vector<8xf32>
    %26 = vector.multi_reduction <add>, %25, %cst_17 [1] : vector<8x8xf32> to vector<8xf32>
    %27 = vector.shape_cast %26 : vector<8xf32> to vector<8x1xf32>
    %28 = math.exp %13 : vector<8x8xf32>
    %cst_18 = arith.constant 0.000000e+00 : f32
    %29 = vector.broadcast %cst_18 : f32 to vector<8x8xf32>
    %30 = arith.select %18, %29, %28 : vector<8x8xi1>, vector<8x8xf32>
    %cst_19 = arith.constant dense<0.000000e+00> : vector<8xf32>
    %31 = vector.multi_reduction <add>, %30, %cst_19 [1] : vector<8x8xf32> to vector<8xf32>
    %32 = vector.shape_cast %31 : vector<8xf32> to vector<8x1xf32>
    %33 = vector.broadcast %11 : vector<8x1xf32> to vector<8x8xf32>
    %34 = arith.subf %6, %33 : vector<8x8xf32>
    %35 = math.exp %34 : vector<8x8xf32>
    %cst_20 = arith.constant dense<0.000000e+00> : vector<8xf32>
    %36 = vector.multi_reduction <add>, %35, %cst_20 [1] : vector<8x8xf32> to vector<8xf32>
    %37 = vector.shape_cast %36 : vector<8xf32> to vector<8x1xf32>
    %38 = arith.addf %32, %37 : vector<8x1xf32>
    %cst_21 = arith.constant 0.000000e+00 : f32
    %39 = vector.broadcast %cst_21 : f32 to vector<8x1xf32>
    %40 = arith.subf %39, %27 : vector<8x1xf32>
    %41 = arith.divf %40, %23 : vector<8x1xf32>
    %42 = math.log %38 : vector<8x1xf32>
    %43 = arith.subf %41, %42 : vector<8x1xf32>
    %c0_22 = arith.constant 0 : index
    %c0_23 = arith.constant 0 : index
    %44 = vector.load %arg5[%c0_22, %c0_23] : memref<8x1xf32, #tpu.memory_space<vmem>>, vector<8x1xf32>
    tpu.vector_store %arg5[%c0_22, %c0_23], %43 {strides = array<i32>} : memref<8x1xf32, #tpu.memory_space<vmem>>, vector<8x1xf32>,
    return
  }
  func.func @transform_0(%arg0: i32) -> (i32, i32) {
    %c0_i32 = arith.constant 0 : i32
    %c0_i32_0 = arith.constant 0 : i32
    %c0_i32_1 = arith.constant 0 : i32
    return %c0_i32, %c0_i32_0 : i32, i32
  }
  func.func @transform_1(%arg0: i32) -> (i32, i32) {
    %c0_i32 = arith.constant 0 : i32
    %c0_i32_0 = arith.constant 0 : i32
    %c0_i32_1 = arith.constant 0 : i32
    return %c0_i32, %c0_i32_0 : i32, i32
  }
  func.func @transform_2(%arg0: i32) -> (i32, i32) {
    %c0_i32 = arith.constant 0 : i32
    %c0_i32_0 = arith.constant 0 : i32
    return %arg0, %c0_i32 : i32, i32
  }
  func.func @transform_3(%arg0: i32) -> (i32, i32) {
    %c0_i32 = arith.constant 0 : i32
    %c0_i32_0 = arith.constant 0 : i32
    %c0_i32_1 = arith.constant 0 : i32
    return %c0_i32, %c0_i32_0 : i32, i32
  }
  func.func @transform_4(%arg0: i32) -> (i32, i32) {
    %c0_i32 = arith.constant 0 : i32
    %c0_i32_0 = arith.constant 0 : i32
    return %arg0, %c0_i32 : i32, i32
  }
}

</mosaic_0001>

<llo_original>
// kernel: tpu_custom_call.1
$region0: #{tpu_custom_call.1}
  #allocation0 [shape = 'u32[]', space=smem, size = 0x4, offset = 0x4, fixed_abs, tag = 'smem constant byte address 0x4 - core index']
  #allocation1 [shape = 'u32[144,128]{1,0:T(1,128)}', space=vmem, size = 0x12000, scoped, tag = 'internal scratch']
  %s0 = inlined_call_operand.vmem [shape: f32[8,32], index: 0, kind: input, shape index: {}]
  %s1 = inlined_call_operand.vmem [shape: s32[1,8], index: 1, kind: input, shape index: {}]
  %s2 = inlined_call_operand.vmem [shape: s32[8,1], index: 2, kind: input, shape index: {}]
  %s3 = inlined_call_operand.hbm [shape: f32[8,32], index: 3, kind: input, shape index: {}]
  %s4 = inlined_call_operand.vmem [shape: f32[8,1], index: 4, kind: output, shape index: {}]
  %s5 = sld [smem:[#allocation0]]
  $region30: #{tpu_custom_call.1} parent=0
    _
  %s7 = ssub.s32 1, %s5
  %s8 = scalar_select 0, %s7, %s5
  $region1: #{tpu_custom_call.1} parent=0
    #allocation2 [shape = 'u8[4096]{0}', space=vmem, size = 0x1000, scoped, tag = 'input window, operand 3, single buffered']
    #allocation3 [shape = 's32[1]{0}', space=sflag, size = 0x4, scoped, tag = 'scoped memory for tpu_custom_call.1']
    %9 = vsyncpa [#allocation3], 0
    // Predicated region
    $region2: #{tpu_custom_call.1} parent=1 // pred_check
      _
    $region3: #{tpu_custom_call.1} parent=1 // pred_check_branch
      %11 = sbr.rel (0) target = $region5
    $region4: #{tpu_custom_call.1} parent=1 // pred_region
      _
    $region5: #{tpu_custom_call.1} parent=1 // pred_fallthru
      _
    // Predicated region
    $region6: #{tpu_custom_call.1} parent=1 // pred_check
      _
    $region7: #{tpu_custom_call.1} parent=1 // pred_check_branch
      %13 = sbr.rel (0) target = $region9
    $region8: #{tpu_custom_call.1} parent=1 // pred_region
      _
    $region9: #{tpu_custom_call.1} parent=1 // pred_fallthru
      _
    // Predicated region
    $region10: #{tpu_custom_call.1} parent=1 // pred_check
      _
    $region11: #{tpu_custom_call.1} parent=1 // pred_check_branch
      %15 = sbr.rel (0) target = $region13
    $region12: #{tpu_custom_call.1} parent=1 // pred_region
      _
    $region13: #{tpu_custom_call.1} parent=1 // pred_fallthru
      _
    // Predicated region
    $region14: #{tpu_custom_call.1} parent=1 // pred_check
      _
    $region15: #{tpu_custom_call.1} parent=1 // pred_check_branch
      %17 = sbr.rel (0) target = $region17
    $region16: #{tpu_custom_call.1} parent=1 // pred_region
      %s19 = ssub.s32 128, 128
      %20 = vsyncadd [#allocation3], %s19
      %s22 = sshll.u32 [#allocation2], 4
      %s23 = int_to_ptr.vmem [resolvable:$true] %s22
      %25 = dma.hbm_to_vmem [thread:$0]  %s3, 128, %s23, [#allocation3]
    $region17: #{tpu_custom_call.1} parent=1 // pred_fallthru
      _
    // Predicated region
    $region18: #{tpu_custom_call.1} parent=1 // pred_check
      _
    $region19: #{tpu_custom_call.1} parent=1 // pred_check_branch
      %27 = sbr.rel (0) target = $region21
    $region20: #{tpu_custom_call.1} parent=1 // pred_region
      %28 = dma.done [#allocation3], 128
    $region21: #{tpu_custom_call.1} parent=1 // pred_fallthru
      _
    %v29 = vld [vmem:[%s0] sm:$0xff]
    %v30 = vmul.f32 %v29, 0.33333334
    %vm31 = vcmask 261120
    %v33 = vsel %vm31, %v30, 0
    %v36 = vsel %vm31, %v29, 0
    %38 = vmatprep.subr.mxu0 0.0
    %39 = vmatpush1.xpose.msra.mxu0 0.0
    %40 = vmatprep.subr.mxu0 0.0
    %41 = vmatpush1.xpose.msra.mxu0 0.0
    %42 = vmatprep.subr.mxu0 0.0
    %43 = vmatpush1.xpose.msra.mxu0 0.0
    %44 = vmatprep.subr.mxu0 0.0
    %45 = vmatpush1.xpose.msra.mxu0 0.0
    %46 = vmatprep.subr.mxu0 0.0
    %47 = vmatpush1.xpose.msra.mxu0 0.0
    %48 = vmatprep.subr.mxu0 0.0
    %49 = vmatpush1.xpose.msra.mxu0 0.0
    %50 = vmatprep.subr.mxu0 0.0
    %51 = vmatpush1.xpose.msra.mxu0 0.0
    %52 = vmatprep.subr.mxu0 0.0
    %53 = vmatpush1.xpose.msra.mxu0 0.0
    %54 = vmatprep.subr.mxu0 0.0
    %55 = vmatpush1.xpose.msra.mxu0 0.0
    %56 = vmatprep.subr.mxu0 0.0
    %57 = vmatpush1.xpose.msra.mxu0 0.0
    %58 = vmatprep.subr.mxu0 0.0
    %59 = vmatpush1.xpose.msra.mxu0 0.0
    %60 = vmatprep.subr.mxu0 0.0
    %61 = vmatpush1.xpose.msra.mxu0 0.0
    %62 = vmatprep.subr.mxu0 0.0
    %63 = vmatpush1.xpose.msra.mxu0 0.0
    %64 = vmatprep.subr.mxu0 0.0
    %65 = vmatpush1.xpose.msra.mxu0 0.0
    %66 = vmatprep.subr.mxu0 0.0
    %67 = vmatpush1.xpose.msra.mxu0 0.0
    %68 = vmatprep.subr.mxu0 0.0
    %69 = vmatpush1.xpose.msra.mxu0 %v36
    %70 = vmatprep.subr.mxu0 0.0
    %71 = vmatpush2.xpose.msra.mxu0 0.0
    %72 = vmatprep.subr.mxu0 0.0
    %73 = vmatpush2.xpose.msra.mxu0 0.0
    %74 = vmatprep.subr.mxu0 0.0
    %75 = vmatpush2.xpose.msra.mxu0 0.0
    %76 = vmatprep.subr.mxu0 0.0
    %77 = vmatpush2.xpose.msra.mxu0 0.0
    %78 = vmatprep.subr.mxu0 0.0
    %79 = vmatpush2.xpose.msra.mxu0 0.0
    %80 = vmatprep.subr.mxu0 0.0
    %81 = vmatpush2.xpose.msra.mxu0 0.0
    %82 = vmatprep.subr.mxu0 0.0
    %83 = vmatpush2.xpose.msra.mxu0 0.0
    %84 = vmatprep.subr.mxu0 0.0
    %85 = vmatpush2.xpose.msra.mxu0 0.0
    %86 = vmatprep.subr.mxu0 0.0
    %87 = vmatpush2.xpose.msra.mxu0 0.0
    %88 = vmatprep.subr.mxu0 0.0
    %89 = vmatpush2.xpose.msra.mxu0 0.0
    %90 = vmatprep.subr.mxu0 0.0
    %91 = vmatpush2.xpose.msra.mxu0 0.0
    %92 = vmatprep.subr.mxu0 0.0
    %93 = vmatpush2.xpose.msra.mxu0 0.0
    %94 = vmatprep.subr.mxu0 0.0
    %95 = vmatpush2.xpose.msra.mxu0 0.0
    %96 = vmatprep.subr.mxu0 0.0
    %97 = vmatpush2.xpose.msra.mxu0 0.0
    %98 = vmatprep.subr.mxu0 0.0
    %99 = vmatpush2.xpose.msra.mxu0 0.0
    %100 = vmatprep.subr.mxu0 0.0
    %101 = vmatpush2.xpose.msra.mxu0 0.0
    %102 = vmatprep.mubr.f32.mxu0 0.0
    %103 = vmatmul.mubr.f32.gmra.mxu0 %v33
    %v104 = vpop.f32.mrf.mxu0
    %v105 = vadd.f32 0.0, %v104
    %v106 = vpop.f32.mrf.mxu0
    %107 = vdwg.mxu0
    %v108 = vld [vmem:[#allocation2] sm:$0xff]
    %v110 = vsel %vm31, %v108, 0
    %112 = vmatprep.subr.mxu0 0.0
    %113 = vmatpush1.xpose.msra.mxu0 0.0
    %114 = vmatprep.subr.mxu0 0.0
    %115 = vmatpush1.xpose.msra.mxu0 0.0
    %116 = vmatprep.subr.mxu0 0.0
    %117 = vmatpush1.xpose.msra.mxu0 0.0
    %118 = vmatprep.subr.mxu0 0.0
    %119 = vmatpush1.xpose.msra.mxu0 0.0
    %120 = vmatprep.subr.mxu0 0.0
    %121 = vmatpush1.xpose.msra.mxu0 0.0
    %122 = vmatprep.subr.mxu0 0.0
    %123 = vmatpush1.xpose.msra.mxu0 0.0
    %124 = vmatprep.subr.mxu0 0.0
    %125 = vmatpush1.xpose.msra.mxu0 0.0
    %126 = vmatprep.subr.mxu0 0.0
    %127 = vmatpush1.xpose.msra.mxu0 0.0
    %128 = vmatprep.subr.mxu0 0.0
    %129 = vmatpush1.xpose.msra.mxu0 0.0
    %130 = vmatprep.subr.mxu0 0.0
    %131 = vmatpush1.xpose.msra.mxu0 0.0
    %132 = vmatprep.subr.mxu0 0.0
    %133 = vmatpush1.xpose.msra.mxu0 0.0
    %134 = vmatprep.subr.mxu0 0.0
    %135 = vmatpush1.xpose.msra.mxu0 0.0
    %136 = vmatprep.subr.mxu0 0.0
    %137 = vmatpush1.xpose.msra.mxu0 0.0
    %138 = vmatprep.subr.mxu0 0.0
    %139 = vmatpush1.xpose.msra.mxu0 0.0
    %140 = vmatprep.subr.mxu0 0.0
    %141 = vmatpush1.xpose.msra.mxu0 0.0
    %142 = vmatprep.subr.mxu0 0.0
    %143 = vmatpush1.xpose.msra.mxu0 %v110
    %144 = vmatprep.subr.mxu0 0.0
    %145 = vmatpush2.xpose.msra.mxu0 0.0
    %146 = vmatprep.subr.mxu0 0.0
    %147 = vmatpush2.xpose.msra.mxu0 0.0
    %148 = vmatprep.subr.mxu0 0.0
    %149 = vmatpush2.xpose.msra.mxu0 0.0
    %150 = vmatprep.subr.mxu0 0.0
    %151 = vmatpush2.xpose.msra.mxu0 0.0
    %152 = vmatprep.subr.mxu0 0.0
    %153 = vmatpush2.xpose.msra.mxu0 0.0
    %154 = vmatprep.subr.mxu0 0.0
    %155 = vmatpush2.xpose.msra.mxu0 0.0
    %156 = vmatprep.subr.mxu0 0.0
    %157 = vmatpush2.xpose.msra.mxu0 0.0
    %158 = vmatprep.subr.mxu0 0.0
    %159 = vmatpush2.xpose.msra.mxu0 0.0
    %160 = vmatprep.subr.mxu0 0.0
    %161 = vmatpush2.xpose.msra.mxu0 0.0
    %162 = vmatprep.subr.mxu0 0.0
    %163 = vmatpush2.xpose.msra.mxu0 0.0
    %164 = vmatprep.subr.mxu0 0.0
    %165 = vmatpush2.xpose.msra.mxu0 0.0
    %166 = vmatprep.subr.mxu0 0.0
    %167 = vmatpush2.xpose.msra.mxu0 0.0
    %168 = vmatprep.subr.mxu0 0.0
    %169 = vmatpush2.xpose.msra.mxu0 0.0
    %170 = vmatprep.subr.mxu0 0.0
    %171 = vmatpush2.xpose.msra.mxu0 0.0
    %172 = vmatprep.subr.mxu0 0.0
    %173 = vmatpush2.xpose.msra.mxu0 0.0
    %174 = vmatprep.subr.mxu0 0.0
    %175 = vmatpush2.xpose.msra.mxu0 0.0
    %176 = vmatprep.mubr.f32.mxu0 0.0
    %177 = vmatmul.mubr.f32.gmra.mxu0 %v33
    %v178 = vpop.f32.mrf.mxu0
    %v179 = vadd.f32 0.0, %v178
    %v180 = vpop.f32.mrf.mxu0
    %181 = vdwg.mxu0
    %vm182 = vcmask 64512
    %v183 = vsel %vm182, %v105, -inf
    %184 = vmax.xlane.f32.xlu0 %v183
    %v185 = vpop.xlane.xlu0 %184
    %v186 = vsel %vm182, %v179, -inf
    %187 = vmax.xlane.f32.xlu0 %v186
    %v188 = vpop.xlane.xlu0 %187
    %v189 = vmax.f32 %v185, %v188
    %v190 = vsub.f32 %v105, %v189
    %v191 = vld [vmem:[%s2] sm:$0xff]
    %v192 = vld [vmem:[%s1] sm:$0x1]
    %193 = vset.pattern.permute.xlu0 0
    %194 = vperm.xlu0 %193, %v191
    %v195 = vpop.permute.xlu0 %194
    %v196 = vlaneseq
    %v197 = vshrl.u32 %v196, 7
    %v198 = vsub.s32 0, %v197
    %v199 = vrot.slane %v192, %v198
    %vm200 = vcmp.eq.s32.totalorder %v195, %v199
    %v201 = vsel %vm200, 1.0, 0.0
    %v202 = vsel %vm182, %v201, 0.0
    %203 = vadd.xlane.f32.xlu0 %v202
    %v204 = vpop.xlane.xlu0 %203
    %v205 = vsel %vm200, %v190, 0.0
    %v206 = vsel %vm182, %v205, 0.0
    %207 = vadd.xlane.f32.xlu0 %v206
    %v208 = vpop.xlane.xlu0 %207
    %v209 = vmul.f32 %v190, 1.442695
    %v210 = vpow.pop %v209
    %v211 = vsel %vm200, 0.0, %v210
    %v212 = vsel %vm182, %v211, 0.0
    %213 = vadd.xlane.f32.xlu0 %v212
    %v214 = vpop.xlane.xlu0 %213
    %v215 = vsub.f32 %v179, %v189
    %v216 = vmul.f32 %v215, 1.442695
    %v217 = vpow.pop %v216
    %v218 = vsel %vm182, %v217, 0.0
    %219 = vadd.xlane.f32.xlu0 %v218
    %v220 = vpop.xlane.xlu0 %219
    %v221 = vadd.f32 %v214, %v220
    %v222 = vsub.f32 0.0, %v208
    %v223 = vrcp.pop %v204
    %v224 = vmul.f32 %v222, %v223
    %v225 = vlog2.pop %v221
    %v226 = vmul.f32 %v225, 0.6931472
    %v227 = vsub.f32 %v224, %v226
    %vm228 = vcmask 7168
    %229 = vst.msk [vmem:[%s4] sm:$0xff] %vm228, %v227
    // Predicated region
    $region22: #{tpu_custom_call.1} parent=1 // pred_check
      _
    $region23: #{tpu_custom_call.1} parent=1 // pred_check_branch
      %231 = sbr.rel (0) target = $region25
    $region24: #{tpu_custom_call.1} parent=1 // pred_region
      _
    $region25: #{tpu_custom_call.1} parent=1 // pred_fallthru
      _
    // Predicated region
    $region26: #{tpu_custom_call.1} parent=1 // pred_check
      _
    $region27: #{tpu_custom_call.1} parent=1 // pred_check_branch
      %233 = sbr.rel (0) target = $region29
    $region28: #{tpu_custom_call.1} parent=1 // pred_region
      _
    $region29: #{tpu_custom_call.1} parent=1 // pred_fallthru
      _
    %234 = vsyncpa [#allocation3], 1

</llo_original>
